<compile_context>
chip_gen: v5e
topology: v5e:2x2
jax: 0.10.0
libtpu: 0.0.40
codegen_flags: <defaults>
</compile_context>

<pallas_src>
import functools

import jax
import jax.numpy as jnp
from jax.experimental import pallas as pl
from jax.experimental.pallas import tpu as pltpu

INPUT_SIZE = 48
LABELS_LENGTH = 24
WIDTH = INPUT_SIZE + LABELS_LENGTH          # 72 (input_size_with_label)
HIDDEN = 48 + LABELS_LENGTH                 # 72 (hidden_size after += labels_length)
LANE = 128                                  # lane-dense padding width for weights


def _cvae_kernel(x_ref, lab_ref, eps_ref,
                 w1x_ref, w1l_ref, b1_ref,
                 w2_ref, b2_ref,
                 w3_ref, b3_ref,
                 w4_ref, b4_ref,
                 recon_ref, mu_ref, logvar_ref):
    # inputs arrive in native f32 (no wrapper cast pass); cast MXU operands here.
    x = x_ref[...].astype(jnp.bfloat16)                       # (TB, 48)
    lab = lab_ref[...].astype(jnp.bfloat16)                   # (TB, 24)

    # encode: h = relu(fc1([x, labels]))  -- split-K form of the concat
    h = (jnp.dot(x, w1x_ref[...], preferred_element_type=jnp.float32)
         + jnp.dot(lab, w1l_ref[...], preferred_element_type=jnp.float32)
         + b1_ref[...])                                       # (TB, 128) f32
    h = jnp.maximum(h, 0.0)                                   # lanes [72,128) == 0

    # fused fc21|fc22 head: one (128,256) matmul, mu lanes [0,128), logvar [128,256)
    head = (jnp.dot(h.astype(jnp.bfloat16), w2_ref[...],
                    preferred_element_type=jnp.float32)
            + b2_ref[...])                                    # (TB, 256) f32
    mu = head[:, :LANE]                                       # pad lanes exactly 0
    logvar = head[:, LANE:]                                   # pad lanes exactly 0

    # reparameterize: z = eps * exp(0.5*logvar) + mu, all in f32 (eps stays f32).
    # eps comes in 128 lanes; lanes [72,128) see std==1, mu==0 and then multiply
    # the zero rows of w3, so they contribute exactly 0 to the decoder.
    z = eps_ref[...] * jnp.exp(0.5 * logvar) + mu             # (TB, 128) f32

    # decode (torch.cat((z, labels), 1) in the reference is discarded -> omitted)
    h3 = jnp.maximum(
        jnp.dot(z.astype(jnp.bfloat16), w3_ref[...],
                preferred_element_type=jnp.float32) + b3_ref[...], 0.0)
    recon = jax.nn.sigmoid(
        jnp.dot(h3.astype(jnp.bfloat16), w4_ref[...],
                preferred_element_type=jnp.float32) + b4_ref[...])

    # bf16 outputs at natural widths: half the write bytes of f32 and no wrapper
    # slicing afterwards.  Each output block is a fully contiguous HBM DMA.
    recon_ref[...] = recon[:, :INPUT_SIZE].astype(jnp.bfloat16)
    mu_ref[...] = mu[:, :HIDDEN].astype(jnp.bfloat16)
    logvar_ref[...] = logvar[:, :HIDDEN].astype(jnp.bfloat16)


def _pad_weight(w, k_pad, n_pad):
    k, n = w.shape
    return (jnp.zeros((k_pad, n_pad), jnp.float32)
            .at[:k, :n].set(w).astype(jnp.bfloat16))


def _pad_bias(b, n_pad):
    return jnp.zeros((1, n_pad), jnp.float32).at[0, :b.shape[0]].set(b)


def pack_params(params):
    """Split fc1, fuse fc21|fc22, zero-pad K/N dims to 128 lanes, cast weights to bf16."""
    (w1, b1), (w21, b21), (w22, b22), (w3, b3), (w4, b4) = params
    w1x = _pad_weight(w1[:INPUT_SIZE], INPUT_SIZE, LANE)      # (48, 128)
    w1l = _pad_weight(w1[INPUT_SIZE:], LABELS_LENGTH, LANE)   # (24, 128)
    b1p = _pad_bias(b1, LANE)
    w2 = (jnp.zeros((LANE, 2 * LANE), jnp.float32)
          .at[:WIDTH, :HIDDEN].set(w21)
          .at[:WIDTH, LANE:LANE + HIDDEN].set(w22)).astype(jnp.bfloat16)
    b2 = (jnp.zeros((1, 2 * LANE), jnp.float32)
          .at[0, :HIDDEN].set(b21)
          .at[0, LANE:LANE + HIDDEN].set(b22))
    w3p = _pad_weight(w3, LANE, LANE)
    b3p = _pad_bias(b3, LANE)
    w4p = _pad_weight(w4, LANE, LANE)
    b4p = _pad_bias(b4, LANE)
    return (w1x, w1l, b1p, w2, b2, w3p, b3p, w4p, b4p)


def _round_up(n, m):
    return -(-n // m) * m


@functools.partial(jax.jit, static_argnames=("tb",))
def char_cvae_forward(x, labels, packed_params, eps, *, tb=2048):
    """char_CVAE forward.

    x: (B, 1, 48) or (B, 48) f32; labels: (B, 24) f32.
    eps: (B, 128) f32 standard-normal noise; only the first 72 columns are used
    (drawing it lane-padded avoids a wrapper pad pass and any in-kernel concat).
    Returns (recon (B,48), mu (B,72), logvar (B,72)) in bfloat16.
    """
    B = x.shape[0]
    x2d = x.reshape(B, INPUT_SIZE)                            # metadata-only reshape

    TB = min(tb, _round_up(B, 8))                             # batch tile, 8-sublane aligned
    grid = (pl.cdiv(B, TB),)                                  # partial last block is masked

    w1x, w1l, b1p, w2, b2, w3p, b3p, w4p, b4p = packed_params
    weights = (w1x, w1l, b1p, w2, b2, w3p, b3p, w4p, b4p)
    args = (x2d, labels, eps) + weights

    def row_spec(feat):
        return pl.BlockSpec((TB, feat), lambda i: (i, 0))

    def resident_spec(arr):                                   # fetched once, VMEM-resident
        return pl.BlockSpec(arr.shape, lambda i: (0, 0))

    in_specs = ([row_spec(INPUT_SIZE), row_spec(LABELS_LENGTH), row_spec(LANE)]
                + [resident_spec(a) for a in weights])

    out_shape = (jax.ShapeDtypeStruct((B, INPUT_SIZE), jnp.bfloat16),   # recon
                 jax.ShapeDtypeStruct((B, HIDDEN), jnp.bfloat16),       # mu
                 jax.ShapeDtypeStruct((B, HIDDEN), jnp.bfloat16))       # logvar
    out_specs = (row_spec(INPUT_SIZE), row_spec(HIDDEN), row_spec(HIDDEN))

    weight_bytes = sum(int(a.size) * a.dtype.itemsize for a in weights)
    cost = pl.CostEstimate(
        flops=2 * B * (INPUT_SIZE * LANE + LABELS_LENGTH * LANE
                       + LANE * 2 * LANE + LANE * LANE + LANE * LANE),
        transcendentals=B * 2 * LANE,
        bytes_accessed=B * ((INPUT_SIZE + LABELS_LENGTH + LANE) * 4
                            + (INPUT_SIZE + 2 * HIDDEN) * 2) + weight_bytes,
    )

    return pl.pallas_call(
        _cvae_kernel,
        out_shape=out_shape,
        grid=grid,
        in_specs=in_specs,
        out_specs=out_specs,
        compiler_params=pltpu.CompilerParams(
            dimension_semantics=("parallel",)),               # megacore-shard batch tiles
        cost_estimate=cost,
    )(*args)


def init_params(key):
    """Deterministic parameter init (uniform +-1/sqrt(fan_in), like PyTorch)."""
    def linear(key, fan_in, fan_out):
        kw, kb = jax.random.split(key)
        bound = 1.0 / jnp.sqrt(fan_in)
        w = jax.random.uniform(kw, (fan_in, fan_out), jnp.float32, -bound, bound)
        b = jax.random.uniform(kb, (fan_out,), jnp.float32, -bound, bound)
        return w, b

    keys = jax.random.split(key, 5)
    return (
        linear(keys[0], WIDTH, WIDTH),      # fc1
        linear(keys[1], WIDTH, HIDDEN),     # fc21
        linear(keys[2], WIDTH, HIDDEN),     # fc22
        linear(keys[3], HIDDEN, WIDTH),     # fc3
        linear(keys[4], WIDTH, INPUT_SIZE)  # fc4
    )


def _reference(x, labels, params, eps):
    """Pure-JAX f32 reference of the same forward pass (eps: (B, 72))."""
    B = x.shape[0]
    (w1, b1), (w21, b21), (w22, b22), (w3, b3), (w4, b4) = params
    xc = jnp.concatenate([x.reshape(B, INPUT_SIZE), labels], axis=1)
    h = jnp.maximum(xc @ w1 + b1, 0.0)
    mu = h @ w21 + b21
    logvar = h @ w22 + b22
    z = eps * jnp.exp(0.5 * logvar) + mu
    h3 = jnp.maximum(z @ w3 + b3, 0.0)
    recon = jax.nn.sigmoid(h3 @ w4 + b4)
    return recon, mu, logvar


if __name__ == "__main__":
    key = jax.random.PRNGKey(0)
    k_params, k_x, k_lab, k_eps = jax.random.split(key, 4)

    B = 8
    params = init_params(k_params)
    packed = pack_params(params)
    x = jax.random.normal(k_x, (B, 1, INPUT_SIZE), jnp.float32)
    labels = jax.nn.one_hot(
        jax.random.randint(k_lab, (B,), 0, LABELS_LENGTH), LABELS_LENGTH
    ).astype(jnp.float32)
    # noise drawn lane-padded (B, 128); only the first 72 columns are used
    eps = jax.random.normal(k_eps, (B, LANE), jnp.float32)

    recon, mu, logvar = char_cvae_forward(x, labels, packed, eps)
    jax.block_until_ready((recon, mu, logvar))

    # sanity check vs pure-JAX f32 reference (bf16 matmuls + bf16 outputs -> loose tol)
    r_ref, mu_ref, lv_ref = _reference(x, labels, params, eps[:, :HIDDEN])
    assert recon.shape == (B, INPUT_SIZE)
    assert mu.shape == (B, HIDDEN) and logvar.shape == (B, HIDDEN)
    assert jnp.allclose(recon.astype(jnp.float32), r_ref, atol=3e-2), "recon mismatch"
    assert jnp.allclose(mu.astype(jnp.float32), mu_ref, atol=3e-2), "mu mismatch"
    assert jnp.allclose(logvar.astype(jnp.float32), lv_ref, atol=3e-2), "logvar mismatch"

    print("KERNEL_OK")
</pallas_src>

<mosaic_0001>
module attributes {stable_mosaic.version = 11 : i64} {
  func.func @_cvae_kernel(%arg0: i32, %arg1: memref<8x48xf32, #tpu.memory_space<vmem>>, %arg2: memref<8x24xf32, #tpu.memory_space<vmem>>, %arg3: memref<8x128xf32, #tpu.memory_space<vmem>>, %arg4: memref<48x128xbf16, #tpu.memory_space<vmem>>, %arg5: memref<24x128xbf16, #tpu.memory_space<vmem>>, %arg6: memref<1x128xf32, #tpu.memory_space<vmem>>, %arg7: memref<128x256xbf16, #tpu.memory_space<vmem>>, %arg8: memref<1x256xf32, #tpu.memory_space<vmem>>, %arg9: memref<128x128xbf16, #tpu.memory_space<vmem>>, %arg10: memref<1x128xf32, #tpu.memory_space<vmem>>, %arg11: memref<128x128xbf16, #tpu.memory_space<vmem>>, %arg12: memref<1x128xf32, #tpu.memory_space<vmem>>, %arg13: memref<8x48xbf16, #tpu.memory_space<vmem>>, %arg14: memref<8x72xbf16, #tpu.memory_space<vmem>>, %arg15: memref<8x72xbf16, #tpu.memory_space<vmem>>) attributes {dimension_semantics = [#tpu.dimension_semantics<parallel>], iteration_bounds = array<i64: 1>, scalar_prefetch = 0 : i64, scratch_operands = 0 : i64, tpu.core_type = #tpu.core_type<tc>, window_params = [{transform_indices = @transform_0, window_bounds = array<i64: 8, 48>}, {transform_indices = @transform_1, window_bounds = array<i64: 8, 24>}, {transform_indices = @transform_2, window_bounds = array<i64: 8, 128>}, {pipeline_mode = #tpu.pipeline_mode<synchronous>, transform_indices = @transform_3, window_bounds = array<i64: 48, 128>}, {pipeline_mode = #tpu.pipeline_mode<synchronous>, transform_indices = @transform_4, window_bounds = array<i64: 24, 128>}, {pipeline_mode = #tpu.pipeline_mode<synchronous>, transform_indices = @transform_5, window_bounds = array<i64: 1, 128>}, {pipeline_mode = #tpu.pipeline_mode<synchronous>, transform_indices = @transform_6, window_bounds = array<i64: 128, 256>}, {pipeline_mode = #tpu.pipeline_mode<synchronous>, transform_indices = @transform_7, window_bounds = array<i64: 1, 256>}, {pipeline_mode = #tpu.pipeline_mode<synchronous>, transform_indices = @transform_8, window_bounds = array<i64: 128, 128>}, {pipeline_mode = #tpu.pipeline_mode<synchronous>, transform_indices = @transform_9, window_bounds = array<i64: 1, 128>}, {pipeline_mode = #tpu.pipeline_mode<synchronous>, transform_indices = @transform_10, window_bounds = array<i64: 128, 128>}, {pipeline_mode = #tpu.pipeline_mode<synchronous>, transform_indices = @transform_11, window_bounds = array<i64: 1, 128>}, {transform_indices = @transform_12, window_bounds = array<i64: 8, 48>}, {transform_indices = @transform_13, window_bounds = array<i64: 8, 72>}, {transform_indices = @transform_14, window_bounds = array<i64: 8, 72>}]} {
    %c0 = arith.constant 0 : index
    %c0_0 = arith.constant 0 : index
    %0 = vector.load %arg1[%c0, %c0_0] : memref<8x48xf32, #tpu.memory_space<vmem>>, vector<8x48xf32>
    %1 = arith.truncf %0 : vector<8x48xf32> to vector<8x48xbf16>
    %c0_1 = arith.constant 0 : index
    %c0_2 = arith.constant 0 : index
    %2 = vector.load %arg2[%c0_1, %c0_2] : memref<8x24xf32, #tpu.memory_space<vmem>>, vector<8x24xf32>
    %3 = arith.truncf %2 : vector<8x24xf32> to vector<8x24xbf16>
    %c0_3 = arith.constant 0 : index
    %c0_4 = arith.constant 0 : index
    %4 = vector.load %arg4[%c0_3, %c0_4] : memref<48x128xbf16, #tpu.memory_space<vmem>>, vector<48x128xbf16>
    %cst = arith.constant dense<0.000000e+00> : vector<8x128xf32>
    %5 = tpu.matmul %1, %4, %cst {dimension_numbers = #tpu.dot_dimension_numbers<[1], [0], [0], [1], [0, 0, 1, 1], [], []>} : vector<8x48xbf16>, vector<48x128xbf16>, vector<8x128xf32> -> vector<8x128xf32>
    %c0_5 = arith.constant 0 : index
    %c0_6 = arith.constant 0 : index
    %6 = vector.load %arg5[%c0_5, %c0_6] : memref<24x128xbf16, #tpu.memory_space<vmem>>, vector<24x128xbf16>
    %cst_7 = arith.constant dense<0.000000e+00> : vector<8x128xf32>
    %7 = tpu.matmul %3, %6, %cst_7 {dimension_numbers = #tpu.dot_dimension_numbers<[1], [0], [0], [1], [0, 0, 1, 1], [], []>} : vector<8x24xbf16>, vector<24x128xbf16>, vector<8x128xf32> -> vector<8x128xf32>
    %8 = arith.addf %5, %7 : vector<8x128xf32>
    %c0_8 = arith.constant 0 : index
    %c0_9 = arith.constant 0 : index
    %9 = vector.load %arg6[%c0_8, %c0_9] : memref<1x128xf32, #tpu.memory_space<vmem>>, vector<1x128xf32>
    %10 = vector.broadcast %9 : vector<1x128xf32> to vector<8x128xf32>
    %11 = arith.addf %8, %10 : vector<8x128xf32>
    %cst_10 = arith.constant 0.000000e+00 : f32
    %12 = vector.broadcast %cst_10 : f32 to vector<8x128xf32>
    %13 = arith.maximumf %11, %12 : vector<8x128xf32>
    %14 = arith.truncf %13 : vector<8x128xf32> to vector<8x128xbf16>
    %c0_11 = arith.constant 0 : index
    %c0_12 = arith.constant 0 : index
    %15 = vector.load %arg7[%c0_11, %c0_12] : memref<128x256xbf16, #tpu.memory_space<vmem>>, vector<128x256xbf16>
    %cst_13 = arith.constant dense<0.000000e+00> : vector<8x256xf32>
    %16 = tpu.matmul %14, %15, %cst_13 {dimension_numbers = #tpu.dot_dimension_numbers<[1], [0], [0], [1], [0, 0, 1, 1], [], []>} : vector<8x128xbf16>, vector<128x256xbf16>, vector<8x256xf32> -> vector<8x256xf32>
    %c0_14 = arith.constant 0 : index
    %c0_15 = arith.constant 0 : index
    %17 = vector.load %arg8[%c0_14, %c0_15] : memref<1x256xf32, #tpu.memory_space<vmem>>, vector<1x256xf32>
    %18 = vector.broadcast %17 : vector<1x256xf32> to vector<8x256xf32>
    %19 = arith.addf %16, %18 : vector<8x256xf32>
    %20 = vector.extract_strided_slice %19 {offsets = [0, 0], sizes = [8, 128], strides = [1, 1]} : vector<8x256xf32> to vector<8x128xf32>
    %21 = vector.extract_strided_slice %19 {offsets = [0, 128], sizes = [8, 128], strides = [1, 1]} : vector<8x256xf32> to vector<8x128xf32>
    %c0_16 = arith.constant 0 : index
    %c0_17 = arith.constant 0 : index
    %22 = vector.load %arg3[%c0_16, %c0_17] : memref<8x128xf32, #tpu.memory_space<vmem>>, vector<8x128xf32>
    %cst_18 = arith.constant 5.000000e-01 : f32
    %23 = vector.broadcast %cst_18 : f32 to vector<8x128xf32>
    %24 = arith.mulf %23, %21 : vector<8x128xf32>
    %25 = math.exp %24 : vector<8x128xf32>
    %26 = arith.mulf %22, %25 : vector<8x128xf32>
    %27 = arith.addf %26, %20 : vector<8x128xf32>
    %28 = arith.truncf %27 : vector<8x128xf32> to vector<8x128xbf16>
    %c0_19 = arith.constant 0 : index
    %c0_20 = arith.constant 0 : index
    %29 = vector.load %arg9[%c0_19, %c0_20] : memref<128x128xbf16, #tpu.memory_space<vmem>>, vector<128x128xbf16>
    %cst_21 = arith.constant dense<0.000000e+00> : vector<8x128xf32>
    %30 = tpu.matmul %28, %29, %cst_21 {dimension_numbers = #tpu.dot_dimension_numbers<[1], [0], [0], [1], [0, 0, 1, 1], [], []>} : vector<8x128xbf16>, vector<128x128xbf16>, vector<8x128xf32> -> vector<8x128xf32>
    %c0_22 = arith.constant 0 : index
    %c0_23 = arith.constant 0 : index
    %31 = vector.load %arg10[%c0_22, %c0_23] : memref<1x128xf32, #tpu.memory_space<vmem>>, vector<1x128xf32>
    %32 = vector.broadcast %31 : vector<1x128xf32> to vector<8x128xf32>
    %33 = arith.addf %30, %32 : vector<8x128xf32>
    %cst_24 = arith.constant 0.000000e+00 : f32
    %34 = vector.broadcast %cst_24 : f32 to vector<8x128xf32>
    %35 = arith.maximumf %33, %34 : vector<8x128xf32>
    %36 = arith.truncf %35 : vector<8x128xf32> to vector<8x128xbf16>
    %c0_25 = arith.constant 0 : index
    %c0_26 = arith.constant 0 : index
    %37 = vector.load %arg11[%c0_25, %c0_26] : memref<128x128xbf16, #tpu.memory_space<vmem>>, vector<128x128xbf16>
    %cst_27 = arith.constant dense<0.000000e+00> : vector<8x128xf32>
    %38 = tpu.matmul %36, %37, %cst_27 {dimension_numbers = #tpu.dot_dimension_numbers<[1], [0], [0], [1], [0, 0, 1, 1], [], []>} : vector<8x128xbf16>, vector<128x128xbf16>, vector<8x128xf32> -> vector<8x128xf32>
    %c0_28 = arith.constant 0 : index
    %c0_29 = arith.constant 0 : index
    %39 = vector.load %arg12[%c0_28, %c0_29] : memref<1x128xf32, #tpu.memory_space<vmem>>, vector<1x128xf32>
    %40 = vector.broadcast %39 : vector<1x128xf32> to vector<8x128xf32>
    %41 = arith.addf %38, %40 : vector<8x128xf32>
    %42 = arith.negf %41 : vector<8x128xf32>
    %43 = math.exp %42 : vector<8x128xf32>
    %cst_30 = arith.constant 1.000000e+00 : f32
    %44 = vector.broadcast %cst_30 : f32 to vector<8x128xf32>
    %45 = arith.addf %44, %43 : vector<8x128xf32>
    %46 = arith.divf %44, %45 : vector<8x128xf32>
    %47 = vector.extract_strided_slice %46 {offsets = [0, 0], sizes = [8, 48], strides = [1, 1]} : vector<8x128xf32> to vector<8x48xf32>
    %48 = arith.truncf %47 : vector<8x48xf32> to vector<8x48xbf16>
    %c0_31 = arith.constant 0 : index
    %c0_32 = arith.constant 0 : index
    %49 = vector.load %arg13[%c0_31, %c0_32] : memref<8x48xbf16, #tpu.memory_space<vmem>>, vector<8x48xbf16>
    tpu.vector_store %arg13[%c0_31, %c0_32], %48 {strides = array<i32>} : memref<8x48xbf16, #tpu.memory_space<vmem>>, vector<8x48xbf16>,
    %50 = vector.extract_strided_slice %20 {offsets = [0, 0], sizes = [8, 72], strides = [1, 1]} : vector<8x128xf32> to vector<8x72xf32>
    %51 = arith.truncf %50 : vector<8x72xf32> to vector<8x72xbf16>
    %c0_33 = arith.constant 0 : index
    %c0_34 = arith.constant 0 : index
    %52 = vector.load %arg14[%c0_33, %c0_34] : memref<8x72xbf16, #tpu.memory_space<vmem>>, vector<8x72xbf16>
    tpu.vector_store %arg14[%c0_33, %c0_34], %51 {strides = array<i32>} : memref<8x72xbf16, #tpu.memory_space<vmem>>, vector<8x72xbf16>,
    %53 = vector.extract_strided_slice %21 {offsets = [0, 0], sizes = [8, 72], strides = [1, 1]} : vector<8x128xf32> to vector<8x72xf32>
    %54 = arith.truncf %53 : vector<8x72xf32> to vector<8x72xbf16>
    %c0_35 = arith.constant 0 : index
    %c0_36 = arith.constant 0 : index
    %55 = vector.load %arg15[%c0_35, %c0_36] : memref<8x72xbf16, #tpu.memory_space<vmem>>, vector<8x72xbf16>
    tpu.vector_store %arg15[%c0_35, %c0_36], %54 {strides = array<i32>} : memref<8x72xbf16, #tpu.memory_space<vmem>>, vector<8x72xbf16>,
    return
  }
  func.func @transform_0(%arg0: i32) -> (i32, i32) {
    %c0_i32 = arith.constant 0 : i32
    %c0_i32_0 = arith.constant 0 : i32
    return %arg0, %c0_i32 : i32, i32
  }
  func.func @transform_1(%arg0: i32) -> (i32, i32) {
    %c0_i32 = arith.constant 0 : i32
    %c0_i32_0 = arith.constant 0 : i32
    return %arg0, %c0_i32 : i32, i32
  }
  func.func @transform_2(%arg0: i32) -> (i32, i32) {
    %c0_i32 = arith.constant 0 : i32
    %c0_i32_0 = arith.constant 0 : i32
    return %arg0, %c0_i32 : i32, i32
  }
  func.func @transform_3(%arg0: i32) -> (i32, i32) {
    %c0_i32 = arith.constant 0 : i32
    %c0_i32_0 = arith.constant 0 : i32
    %c0_i32_1 = arith.constant 0 : i32
    return %c0_i32, %c0_i32_0 : i32, i32
  }
  func.func @transform_4(%arg0: i32) -> (i32, i32) {
    %c0_i32 = arith.constant 0 : i32
    %c0_i32_0 = arith.constant 0 : i32
    %c0_i32_1 = arith.constant 0 : i32
    return %c0_i32, %c0_i32_0 : i32, i32
  }
  func.func @transform_5(%arg0: i32) -> (i32, i32) {
    %c0_i32 = arith.constant 0 : i32
    %c0_i32_0 = arith.constant 0 : i32
    %c0_i32_1 = arith.constant 0 : i32
    return %c0_i32, %c0_i32_0 : i32, i32
  }
  func.func @transform_6(%arg0: i32) -> (i32, i32) {
    %c0_i32 = arith.constant 0 : i32
    %c0_i32_0 = arith.constant 0 : i32
    %c0_i32_1 = arith.constant 0 : i32
    return %c0_i32, %c0_i32_0 : i32, i32
  }
  func.func @transform_7(%arg0: i32) -> (i32, i32) {
    %c0_i32 = arith.constant 0 : i32
    %c0_i32_0 = arith.constant 0 : i32
    %c0_i32_1 = arith.constant 0 : i32
    return %c0_i32, %c0_i32_0 : i32, i32
  }
  func.func @transform_8(%arg0: i32) -> (i32, i32) {
    %c0_i32 = arith.constant 0 : i32
    %c0_i32_0 = arith.constant 0 : i32
    %c0_i32_1 = arith.constant 0 : i32
    return %c0_i32, %c0_i32_0 : i32, i32
  }
  func.func @transform_9(%arg0: i32) -> (i32, i32) {
    %c0_i32 = arith.constant 0 : i32
    %c0_i32_0 = arith.constant 0 : i32
    %c0_i32_1 = arith.constant 0 : i32
    return %c0_i32, %c0_i32_0 : i32, i32
  }
  func.func @transform_10(%arg0: i32) -> (i32, i32) {
    %c0_i32 = arith.constant 0 : i32
    %c0_i32_0 = arith.constant 0 : i32
    %c0_i32_1 = arith.constant 0 : i32
    return %c0_i32, %c0_i32_0 : i32, i32
  }
  func.func @transform_11(%arg0: i32) -> (i32, i32) {
    %c0_i32 = arith.constant 0 : i32
    %c0_i32_0 = arith.constant 0 : i32
    %c0_i32_1 = arith.constant 0 : i32
    return %c0_i32, %c0_i32_0 : i32, i32
  }
  func.func @transform_12(%arg0: i32) -> (i32, i32) {
    %c0_i32 = arith.constant 0 : i32
    %c0_i32_0 = arith.constant 0 : i32
    return %arg0, %c0_i32 : i32, i32
  }
  func.func @transform_13(%arg0: i32) -> (i32, i32) {
    %c0_i32 = arith.constant 0 : i32
    %c0_i32_0 = arith.constant 0 : i32
    return %arg0, %c0_i32 : i32, i32
  }
  func.func @transform_14(%arg0: i32) -> (i32, i32) {
    %c0_i32 = arith.constant 0 : i32
    %c0_i32_0 = arith.constant 0 : i32
    return %arg0, %c0_i32 : i32, i32
  }
}

</mosaic_0001>

<llo_original>
// kernel: char_cvae_forward.1
$region0: #{char_cvae_forward.1}
  #allocation0 [shape = 'u32[]', space=smem, size = 0x4, offset = 0x4, fixed_abs, tag = 'smem constant byte address 0x4 - core index']
  #allocation1 [shape = 'u32[72,128]{1,0:T(1,128)}', space=vmem, size = 0x9000, scoped, tag = 'internal scratch']
  %s0 = inlined_call_operand.hbm [shape: f32[8,48], index: 0, kind: input, shape index: {}]
  %s1 = inlined_call_operand.hbm [shape: f32[8,24], index: 1, kind: input, shape index: {}]
  %s2 = inlined_call_operand.vmem [shape: f32[8,128], index: 2, kind: input, shape index: {}]
  %s3 = inlined_call_operand.hbm [shape: bf16[48,128], index: 3, kind: input, shape index: {}]
  %s4 = inlined_call_operand.hbm [shape: bf16[24,128], index: 4, kind: input, shape index: {}]
  %s5 = inlined_call_operand.vmem [shape: f32[1,128], index: 5, kind: input, shape index: {}]
  %s6 = inlined_call_operand.hbm [shape: bf16[128,256], index: 6, kind: input, shape index: {}]
  %s7 = inlined_call_operand.vmem [shape: f32[1,256], index: 7, kind: input, shape index: {}]
  %s8 = inlined_call_operand.hbm [shape: bf16[128,128], index: 8, kind: input, shape index: {}]
  %s9 = inlined_call_operand.hbm [shape: f32[1,128], index: 9, kind: input, shape index: {}]
  %s10 = inlined_call_operand.hbm [shape: bf16[128,128], index: 10, kind: input, shape index: {}]
  %s11 = inlined_call_operand.hbm [shape: f32[1,128], index: 11, kind: input, shape index: {}]
  %s12 = inlined_call_operand.hbm [shape: bf16[8,48], index: 12, kind: output, shape index: {0}]
  %s13 = inlined_call_operand.hbm [shape: bf16[8,72], index: 13, kind: output, shape index: {1}]
  %s14 = inlined_call_operand.hbm [shape: bf16[8,72], index: 14, kind: output, shape index: {2}]
  %15 = xla_tuple %s12, %s13, %s14
  %s16 = sld [smem:[#allocation0]]
  $region110: #{char_cvae_forward.1} parent=0
    _
  %s18 = ssub.s32 1, %s16
  %s19 = scalar_select 0, %s18, %s16
  $region1: #{char_cvae_forward.1} parent=0
    #allocation2 [shape = 'u8[4096]{0}', space=vmem, size = 0x1000, scoped, tag = 'input window, operand 0, single buffered']
    #allocation3 [shape = 's32[1]{0}', space=sflag, size = 0x4, scoped, tag = 'scoped memory for char_cvae_forward.1']
    #allocation4 [shape = 's32[1]{0}', space=sflag, size = 0x4, scoped, tag = 'scoped memory for char_cvae_forward.1']
    #allocation5 [shape = 'u8[4096]{0}', space=vmem, size = 0x1000, scoped, tag = 'input window, operand 1, single buffered']
    #allocation6 [shape = 's32[1]{0}', space=sflag, size = 0x4, scoped, tag = 'scoped memory for char_cvae_forward.1']
    #allocation7 [shape = 'u8[12288]{0}', space=vmem, size = 0x3000, scoped, tag = 'input window, operand 3, single buffered']
    #allocation8 [shape = 'u8[6144]{0}', space=vmem, size = 0x1800, scoped, tag = 'input window, operand 4, single buffered']
    #allocation9 [shape = 's32[1]{0}', space=sflag, size = 0x4, scoped, tag = 'scoped memory for char_cvae_forward.1']
    #allocation10 [shape = 'u8[65536]{0}', space=vmem, size = 0x10000, scoped, tag = 'input window, operand 6, single buffered']
    #allocation11 [shape = 'u8[32768]{0}', space=vmem, size = 0x8000, scoped, tag = 'input window, operand 8, single buffered']
    #allocation12 [shape = 's32[1]{0}', space=sflag, size = 0x4, scoped, tag = 'scoped memory for char_cvae_forward.1']
    #allocation13 [shape = 'u8[512]{0}', space=vmem, size = 0x400, scoped, tag = 'input window, operand 9, single buffered']
    #allocation14 [shape = 'u8[32768]{0}', space=vmem, size = 0x8000, scoped, tag = 'input window, operand 10, single buffered']
    #allocation15 [shape = 's32[1]{0}', space=sflag, size = 0x4, scoped, tag = 'scoped memory for char_cvae_forward.1']
    #allocation16 [shape = 'u8[512]{0}', space=vmem, size = 0x400, scoped, tag = 'input window, operand 11, single buffered']
    #allocation17 [shape = 'u8[2048]{0}', space=vmem, size = 0x800, scoped, tag = 'output window, operand 0, single buffered']
    #allocation18 [shape = 'u8[2048]{0}', space=vmem, size = 0x800, scoped, tag = 'output window, operand 1, single buffered']
    #allocation19 [shape = 's32[1]{0}', space=sflag, size = 0x4, scoped, tag = 'scoped memory for char_cvae_forward.1']
    #allocation20 [shape = 'u8[2048]{0}', space=vmem, size = 0x800, scoped, tag = 'output window, operand 2, single buffered']
    %20 = vsyncpa [#allocation3], 0
    %21 = vsyncpa [#allocation6], 0
    %22 = vsyncpa [#allocation9], 0
    %23 = vsyncpa [#allocation12], 0
    %24 = vsyncpa [#allocation15], 0
    %25 = vsyncpa [#allocation4], 0
    %26 = vsyncpa [#allocation19], 0
    // Predicated region
    $region2: #{char_cvae_forward.1} parent=1 // pred_check
      _
    $region3: #{char_cvae_forward.1} parent=1 // pred_check_branch
      %28 = sbr.rel (0) target = $region5
    $region4: #{char_cvae_forward.1} parent=1 // pred_region
      %30 = vsyncadd [#allocation3], 0
      %s32 = sshll.u32 %s0, 4
      %s33 = int_to_ptr.hbm [resolvable:$true] %s32
      %s34 = sshll.u32 [#allocation2], 4
      %s35 = int_to_ptr.vmem [resolvable:$true] %s34
      %37 = dma.hbm_to_vmem [thread:$0]  %s33, 128, %s35, [#allocation3]
    $region5: #{char_cvae_forward.1} parent=1 // pred_fallthru
      _
    // Predicated region
    $region6: #{char_cvae_forward.1} parent=1 // pred_check
      _
    $region7: #{char_cvae_forward.1} parent=1 // pred_check_branch
      %39 = sbr.rel (0) target = $region9
    $region8: #{char_cvae_forward.1} parent=1 // pred_region
      %41 = vsyncadd [#allocation6], 0
      %s43 = sshll.u32 %s1, 4
      %s44 = int_to_ptr.hbm [resolvable:$true] %s43
      %s45 = sshll.u32 [#allocation5], 4
      %s46 = int_to_ptr.vmem [resolvable:$true] %s45
      %48 = dma.hbm_to_vmem [thread:$0]  %s44, 128, %s46, [#allocation6]
    $region9: #{char_cvae_forward.1} parent=1 // pred_fallthru
      _
    // Predicated region
    $region10: #{char_cvae_forward.1} parent=1 // pred_check
      _
    $region11: #{char_cvae_forward.1} parent=1 // pred_check_branch
      %50 = sbr.rel (0) target = $region13
    $region12: #{char_cvae_forward.1} parent=1 // pred_region
      _
    $region13: #{char_cvae_forward.1} parent=1 // pred_fallthru
      _
    // Predicated region
    $region14: #{char_cvae_forward.1} parent=1 // pred_check
      _
    $region15: #{char_cvae_forward.1} parent=1 // pred_check_branch
      %52 = sbr.rel (0) target = $region17
    $region16: #{char_cvae_forward.1} parent=1 // pred_region
      %54 = vsyncadd [#allocation6], 0
      %s55 = sshll.u32 %s3, 4
      %s56 = int_to_ptr.hbm [resolvable:$true] %s55
      %s57 = sshll.u32 [#allocation7], 4
      %s58 = int_to_ptr.vmem [resolvable:$true] %s57
      %63 = dma.hbm_to_vmem [thread:$0]  %s56, 384, %s58, [#allocation6], 64, 64, 4
    $region17: #{char_cvae_forward.1} parent=1 // pred_fallthru
      _
    // Predicated region
    $region18: #{char_cvae_forward.1} parent=1 // pred_check
      _
    $region19: #{char_cvae_forward.1} parent=1 // pred_check_branch
      %65 = sbr.rel (0) target = $region21
    $region20: #{char_cvae_forward.1} parent=1 // pred_region
      %67 = vsyncadd [#allocation9], 0
      %s68 = sshll.u32 %s4, 4
      %s69 = int_to_ptr.hbm [resolvable:$true] %s68
      %s70 = sshll.u32 [#allocation8], 4
      %s71 = int_to_ptr.vmem [resolvable:$true] %s70
      %76 = dma.hbm_to_vmem [thread:$0]  %s69, 192, %s71, [#allocation9], 64, 64, 4
    $region21: #{char_cvae_forward.1} parent=1 // pred_fallthru
      _
    // Predicated region
    $region22: #{char_cvae_forward.1} parent=1 // pred_check
      _
    $region23: #{char_cvae_forward.1} parent=1 // pred_check_branch
      %78 = sbr.rel (0) target = $region25
    $region24: #{char_cvae_forward.1} parent=1 // pred_region
      _
    $region25: #{char_cvae_forward.1} parent=1 // pred_fallthru
      _
    // Predicated region
    $region26: #{char_cvae_forward.1} parent=1 // pred_check
      _
    $region27: #{char_cvae_forward.1} parent=1 // pred_check_branch
      %80 = sbr.rel (0) target = $region29
    $region28: #{char_cvae_forward.1} parent=1 // pred_region
      %82 = vsyncadd [#allocation9], 0
      %s83 = sshll.u32 %s6, 4
      %s84 = int_to_ptr.hbm [resolvable:$true] %s83
      %s85 = sshll.u32 [#allocation10], 4
      %s86 = int_to_ptr.vmem [resolvable:$true] %s85
      %91 = dma.hbm_to_vmem [thread:$0]  %s84, 2048, %s86, [#allocation9], 128, 128, 8
    $region29: #{char_cvae_forward.1} parent=1 // pred_fallthru
      _
    // Predicated region
    $region30: #{char_cvae_forward.1} parent=1 // pred_check
      _
    $region31: #{char_cvae_forward.1} parent=1 // pred_check_branch
      %93 = sbr.rel (0) target = $region33
    $region32: #{char_cvae_forward.1} parent=1 // pred_region
      _
    $region33: #{char_cvae_forward.1} parent=1 // pred_fallthru
      _
    // Predicated region
    $region34: #{char_cvae_forward.1} parent=1 // pred_check
      _
    $region35: #{char_cvae_forward.1} parent=1 // pred_check_branch
      %95 = sbr.rel (0) target = $region37
    $region36: #{char_cvae_forward.1} parent=1 // pred_region
      %97 = vsyncadd [#allocation12], 0
      %s98 = sshll.u32 %s8, 4
      %s99 = int_to_ptr.hbm [resolvable:$true] %s98
      %s100 = sshll.u32 [#allocation11], 4
      %s101 = int_to_ptr.vmem [resolvable:$true] %s100
      %106 = dma.hbm_to_vmem [thread:$0]  %s99, 1024, %s101, [#allocation12], 64, 64, 4
    $region37: #{char_cvae_forward.1} parent=1 // pred_fallthru
      _
    // Predicated region
    $region38: #{char_cvae_forward.1} parent=1 // pred_check
      _
    $region39: #{char_cvae_forward.1} parent=1 // pred_check_branch
      %108 = sbr.rel (0) target = $region41
    $region40: #{char_cvae_forward.1} parent=1 // pred_region
      %110 = vsyncadd [#allocation12], 0
      %s112 = sshll.u32 %s9, 4
      %s113 = int_to_ptr.hbm [resolvable:$true] %s112
      %s114 = sshll.u32 [#allocation13], 4
      %s115 = int_to_ptr.vmem [resolvable:$true] %s114
      %117 = dma.hbm_to_vmem [thread:$0]  %s113, 16, %s115, [#allocation12]
    $region41: #{char_cvae_forward.1} parent=1 // pred_fallthru
      _
    // Predicated region
    $region42: #{char_cvae_forward.1} parent=1 // pred_check
      _
    $region43: #{char_cvae_forward.1} parent=1 // pred_check_branch
      %119 = sbr.rel (0) target = $region45
    $region44: #{char_cvae_forward.1} parent=1 // pred_region
      %121 = vsyncadd [#allocation15], 0
      %s122 = sshll.u32 %s10, 4
      %s123 = int_to_ptr.hbm [resolvable:$true] %s122
      %s124 = sshll.u32 [#allocation14], 4
      %s125 = int_to_ptr.vmem [resolvable:$true] %s124
      %130 = dma.hbm_to_vmem [thread:$0]  %s123, 1024, %s125, [#allocation15], 64, 64, 4
    $region45: #{char_cvae_forward.1} parent=1 // pred_fallthru
      _
    // Predicated region
    $region46: #{char_cvae_forward.1} parent=1 // pred_check
      _
    $region47: #{char_cvae_forward.1} parent=1 // pred_check_branch
      %132 = sbr.rel (0) target = $region49
    $region48: #{char_cvae_forward.1} parent=1 // pred_region
      %134 = vsyncadd [#allocation15], 0
      %s136 = sshll.u32 %s11, 4
      %s137 = int_to_ptr.hbm [resolvable:$true] %s136
      %s138 = sshll.u32 [#allocation16], 4
      %s139 = int_to_ptr.vmem [resolvable:$true] %s138
      %141 = dma.hbm_to_vmem [thread:$0]  %s137, 16, %s139, [#allocation15]
    $region49: #{char_cvae_forward.1} parent=1 // pred_fallthru
      _
    // Predicated region
    $region50: #{char_cvae_forward.1} parent=1 // pred_check
      _
    $region51: #{char_cvae_forward.1} parent=1 // pred_check_branch
      %143 = sbr.rel (0) target = $region53
    $region52: #{char_cvae_forward.1} parent=1 // pred_region
      %145 = dma.done [#allocation3], 128
    $region53: #{char_cvae_forward.1} parent=1 // pred_fallthru
      _
    // Predicated region
    $region54: #{char_cvae_forward.1} parent=1 // pred_check
      _
    $region55: #{char_cvae_forward.1} parent=1 // pred_check_branch
      %147 = sbr.rel (0) target = $region57
    $region56: #{char_cvae_forward.1} parent=1 // pred_region
      %149 = dma.done [#allocation6], 128
    $region57: #{char_cvae_forward.1} parent=1 // pred_fallthru
      _
    // Predicated region
    $region58: #{char_cvae_forward.1} parent=1 // pred_check
      _
    $region59: #{char_cvae_forward.1} parent=1 // pred_check_branch
      %151 = sbr.rel (0) target = $region61
    $region60: #{char_cvae_forward.1} parent=1 // pred_region
      %153 = dma.done [#allocation6], 384
    $region61: #{char_cvae_forward.1} parent=1 // pred_fallthru
      _
    // Predicated region
    $region62: #{char_cvae_forward.1} parent=1 // pred_check
      _
    $region63: #{char_cvae_forward.1} parent=1 // pred_check_branch
      %155 = sbr.rel (0) target = $region65
    $region64: #{char_cvae_forward.1} parent=1 // pred_region
      %157 = dma.done [#allocation9], 192
    $region65: #{char_cvae_forward.1} parent=1 // pred_fallthru
      _
    // Predicated region
    $region66: #{char_cvae_forward.1} parent=1 // pred_check
      _
    $region67: #{char_cvae_forward.1} parent=1 // pred_check_branch
      %159 = sbr.rel (0) target = $region69
    $region68: #{char_cvae_forward.1} parent=1 // pred_region
      %161 = dma.done [#allocation9], 2048
    $region69: #{char_cvae_forward.1} parent=1 // pred_fallthru
      _
    // Predicated region
    $region70: #{char_cvae_forward.1} parent=1 // pred_check
      _
    $region71: #{char_cvae_forward.1} parent=1 // pred_check_branch
      %163 = sbr.rel (0) target = $region73
    $region72: #{char_cvae_forward.1} parent=1 // pred_region
      %165 = dma.done [#allocation12], 1024
    $region73: #{char_cvae_forward.1} parent=1 // pred_fallthru
      _
    // Predicated region
    $region74: #{char_cvae_forward.1} parent=1 // pred_check
      _
    $region75: #{char_cvae_forward.1} parent=1 // pred_check_branch
      %167 = sbr.rel (0) target = $region77
    $region76: #{char_cvae_forward.1} parent=1 // pred_region
      %169 = dma.done [#allocation12], 16
    $region77: #{char_cvae_forward.1} parent=1 // pred_fallthru
      _
    // Predicated region
    $region78: #{char_cvae_forward.1} parent=1 // pred_check
      _
    $region79: #{char_cvae_forward.1} parent=1 // pred_check_branch
      %171 = sbr.rel (0) target = $region81
    $region80: #{char_cvae_forward.1} parent=1 // pred_region
      %173 = dma.done [#allocation15], 1024
    $region81: #{char_cvae_forward.1} parent=1 // pred_fallthru
      _
    // Predicated region
    $region82: #{char_cvae_forward.1} parent=1 // pred_check
      _
    $region83: #{char_cvae_forward.1} parent=1 // pred_check_branch
      %175 = sbr.rel (0) target = $region85
    $region84: #{char_cvae_forward.1} parent=1 // pred_region
      %177 = dma.done [#allocation15], 16
    $region85: #{char_cvae_forward.1} parent=1 // pred_fallthru
      _
    %v179 = vld [vmem:[#allocation2] sm:$0xff]
    %v180 = vpack.c.bf16 %v179, %v179
    %v181 = vld [vmem:[#allocation5] sm:$0xff]
    %v182 = vpack.c.bf16 %v181, %v181
    %v183 = vld [vmem:[#allocation7] sm:$0xf]
    %v184 = vld [vmem:[#allocation7 + $0x4] sm:$0xf]
    %v185 = vld [vmem:[#allocation7 + $0x8] sm:$0xf]
    %v186 = vld [vmem:[#allocation7 + $0xc] sm:$0xf]
    %v187 = vld [vmem:[#allocation7 + $0x10] sm:$0xf]
    %v188 = vld [vmem:[#allocation7 + $0x14] sm:$0xf]
    %v189 = vld [vmem:[#allocation8] sm:$0xf]
    %v190 = vld [vmem:[#allocation8 + $0x4] sm:$0xf]
    %v191 = vld [vmem:[#allocation8 + $0x8] sm:$0xf]
    %v195 = vunpack.c.l.b16 %v189
    %v196 = vunpack.c.l.b16 %v190
    %v197 = vunpack.c.l.b16 %v191
    %v198 = vpack.c.b16 %v196, %v195
    %v199 = vpack.c.b16 %v197, %v197
    %vm201 = vcmask 195584
    %v203 = vsel %vm201, %v182, 0
    %vm205 = vcmask 1043456
    %v207 = vsel %vm205, %v199, 0
    %209 = vmatpush.bf16.msra.mxu0 0
    %210 = vmatpush.bf16.msra.mxu0 0
    %211 = vmatpush.bf16.msra.mxu0 0
    %212 = vmatpush.bf16.msra.mxu0 0
    %213 = vmatpush.bf16.msra.mxu0 0
    %214 = vmatpush.bf16.msra.mxu0 0
    %215 = vmatpush.bf16.msra.mxu0 %v207
    %216 = vmatpush.bf16.msra.mxu0 %v198
    %217 = vmatmul.bf16.gmra.mxu0 %v203
    %v218 = vpop.f32.mrf.mxu0
    %v219 = vadd.f32 0.0, %v218
    %v220 = vpop.f32.mrf.mxu0
    %221 = vdwg.mxu0
    %v228 = vunpack.c.l.b16 %v183
    %v229 = vunpack.c.l.b16 %v184
    %v230 = vunpack.c.l.b16 %v185
    %v231 = vunpack.c.l.b16 %v186
    %v232 = vunpack.c.l.b16 %v187
    %v233 = vunpack.c.l.b16 %v188
    %v234 = vpack.c.b16 %v229, %v228
    %v235 = vpack.c.b16 %v231, %v230
    %v236 = vpack.c.b16 %v233, %v232
    %vm240 = vcmask 392192
    %v242 = vsel %vm240, %v180, 0
    %244 = vmatpush.bf16.msra.mxu0 0
    %245 = vmatpush.bf16.msra.mxu0 0
    %246 = vmatpush.bf16.msra.mxu0 0
    %247 = vmatpush.bf16.msra.mxu0 0
    %248 = vmatpush.bf16.msra.mxu0 0
    %249 = vmatpush.bf16.msra.mxu0 %v236
    %250 = vmatpush.bf16.msra.mxu0 %v235
    %251 = vmatpush.bf16.msra.mxu0 %v234
    %252 = vmatmul.bf16.gmra.mxu0 %v242
    %v253 = vpop.f32.mrf.mxu0
    %v254 = vadd.f32 %v219, %v253
    %v255 = vpop.f32.mrf.mxu0
    %256 = vdwg.mxu0
    %v257 = vld [vmem:[%s5] sm:$0x1]
    %v259 = vperm.slane %v257, 0
    %v261 = vadd.f32 %v254, %v259
    %v262 = vmax.f32 %v261, 0.0
    %v263 = vpack.c.bf16 %v262, %v262
    %v264 = vld [vmem:[#allocation10] sm:$0xff]
    %v265 = vld [vmem:[#allocation10 + $0x8] sm:$0xff]
    %v266 = vld [vmem:[#allocation10 + $0x10] sm:$0xff]
    %v267 = vld [vmem:[#allocation10 + $0x18] sm:$0xff]
    %v268 = vld [vmem:[#allocation10 + $0x20] sm:$0xff]
    %v269 = vld [vmem:[#allocation10 + $0x28] sm:$0xff]
    %v270 = vld [vmem:[#allocation10 + $0x30] sm:$0xff]
    %v271 = vld [vmem:[#allocation10 + $0x38] sm:$0xff]
    %v272 = vld [vmem:[#allocation10 + $0x40] sm:$0xff]
    %v273 = vld [vmem:[#allocation10 + $0x48] sm:$0xff]
    %v274 = vld [vmem:[#allocation10 + $0x50] sm:$0xff]
    %v275 = vld [vmem:[#allocation10 + $0x58] sm:$0xff]
    %v276 = vld [vmem:[#allocation10 + $0x60] sm:$0xff]
    %v277 = vld [vmem:[#allocation10 + $0x68] sm:$0xff]
    %v278 = vld [vmem:[#allocation10 + $0x70] sm:$0xff]
    %v279 = vld [vmem:[#allocation10 + $0x78] sm:$0xff]
    %v280 = vld [vmem:[%s7] sm:$0x3]
    %v282 = vperm.slane %v280, 0
    %v283 = vperm.slane %v280, 1
    %v302 = vunpack.c.l.b16 %v264
    %v303 = vunpack.c.h.b16 %v264
    %v304 = vunpack.c.l.b16 %v265
    %v305 = vunpack.c.h.b16 %v265
    %v306 = vunpack.c.l.b16 %v266
    %v307 = vunpack.c.h.b16 %v266
    %v308 = vunpack.c.l.b16 %v267
    %v309 = vunpack.c.h.b16 %v267
    %v310 = vunpack.c.l.b16 %v268
    %v311 = vunpack.c.h.b16 %v268
    %v312 = vunpack.c.l.b16 %v269
    %v313 = vunpack.c.h.b16 %v269
    %v314 = vunpack.c.l.b16 %v270
    %v315 = vunpack.c.h.b16 %v270
    %v316 = vunpack.c.l.b16 %v271
    %v317 = vunpack.c.h.b16 %v271
    %v318 = vunpack.c.l.b16 %v272
    %v319 = vunpack.c.h.b16 %v272
    %v320 = vunpack.c.l.b16 %v273
    %v321 = vunpack.c.h.b16 %v273
    %v322 = vunpack.c.l.b16 %v274
    %v323 = vunpack.c.h.b16 %v274
    %v324 = vunpack.c.l.b16 %v275
    %v325 = vunpack.c.h.b16 %v275
    %v326 = vunpack.c.l.b16 %v276
    %v327 = vunpack.c.h.b16 %v276
    %v328 = vunpack.c.l.b16 %v277
    %v329 = vunpack.c.h.b16 %v277
    %v330 = vunpack.c.l.b16 %v278
    %v331 = vunpack.c.h.b16 %v278
    %v332 = vunpack.c.l.b16 %v279
    %v333 = vunpack.c.h.b16 %v279
    %v334 = vpack.c.b16 %v304, %v302
    %v335 = vpack.c.b16 %v305, %v303
    %v336 = vpack.c.b16 %v308, %v306
    %v337 = vpack.c.b16 %v309, %v307
    %v338 = vpack.c.b16 %v312, %v310
    %v339 = vpack.c.b16 %v313, %v311
    %v340 = vpack.c.b16 %v316, %v314
    %v341 = vpack.c.b16 %v317, %v315
    %v342 = vpack.c.b16 %v320, %v318
    %v343 = vpack.c.b16 %v321, %v319
    %v344 = vpack.c.b16 %v324, %v322
    %v345 = vpack.c.b16 %v325, %v323
    %v346 = vpack.c.b16 %v328, %v326
    %v347 = vpack.c.b16 %v329, %v327
    %v348 = vpack.c.b16 %v332, %v330
    %v349 = vpack.c.b16 %v333, %v331
    %366 = vmatpush.bf16.msra.mxu0 %v348
    %367 = vmatpush.bf16.msra.mxu0 %v346
    %368 = vmatpush.bf16.msra.mxu0 %v344
    %369 = vmatpush.bf16.msra.mxu0 %v342
    %370 = vmatpush.bf16.msra.mxu0 %v340
    %371 = vmatpush.bf16.msra.mxu0 %v338
    %372 = vmatpush.bf16.msra.mxu0 %v336
    %373 = vmatpush.bf16.msra.mxu0 %v334
    %374 = vmatmul.bf16.gmra.mxu0 %v263
    %v375 = vpop.f32.mrf.mxu0
    %v376 = vadd.f32 %v282, %v375
    %v377 = vpop.f32.mrf.mxu0
    %378 = vdwg.mxu0
    %379 = vmatpush.bf16.msra.mxu0 %v349
    %380 = vmatpush.bf16.msra.mxu0 %v347
    %381 = vmatpush.bf16.msra.mxu0 %v345
    %382 = vmatpush.bf16.msra.mxu0 %v343
    %383 = vmatpush.bf16.msra.mxu0 %v341
    %384 = vmatpush.bf16.msra.mxu0 %v339
    %385 = vmatpush.bf16.msra.mxu0 %v337
    %386 = vmatpush.bf16.msra.mxu0 %v335
    %387 = vmatmul.bf16.gmra.mxu0 %v263
    %v388 = vpop.f32.mrf.mxu0
    %v389 = vadd.f32 %v283, %v388
    %v390 = vpop.f32.mrf.mxu0
    %391 = vdwg.mxu0
    %v392 = vld [vmem:[%s2] sm:$0xff]
    %v393 = vmul.f32 %v389, 0.5
    %v394 = vmul.f32 %v393, 1.442695
    %v395 = vpow.pop %v394
    %v396 = vmul.f32 %v392, %v395
    %v397 = vadd.f32 %v396, %v376
    %v398 = vpack.c.bf16 %v397, %v397
    %v399 = vld [vmem:[#allocation11] sm:$0xf]
    %v400 = vld [vmem:[#allocation11 + $0x4] sm:$0xf]
    %v401 = vld [vmem:[#allocation11 + $0x8] sm:$0xf]
    %v402 = vld [vmem:[#allocation11 + $0xc] sm:$0xf]
    %v403 = vld [vmem:[#allocation11 + $0x10] sm:$0xf]
    %v404 = vld [vmem:[#allocation11 + $0x14] sm:$0xf]
    %v405 = vld [vmem:[#allocation11 + $0x18] sm:$0xf]
    %v406 = vld [vmem:[#allocation11 + $0x1c] sm:$0xf]
    %v407 = vld [vmem:[#allocation11 + $0x20] sm:$0xf]
    %v408 = vld [vmem:[#allocation11 + $0x24] sm:$0xf]
    %v409 = vld [vmem:[#allocation11 + $0x28] sm:$0xf]
    %v410 = vld [vmem:[#allocation11 + $0x2c] sm:$0xf]
    %v411 = vld [vmem:[#allocation11 + $0x30] sm:$0xf]
    %v412 = vld [vmem:[#allocation11 + $0x34] sm:$0xf]
    %v413 = vld [vmem:[#allocation11 + $0x38] sm:$0xf]
    %v414 = vld [vmem:[#allocation11 + $0x3c] sm:$0xf]
    %v415 = vld [vmem:[#allocation13] sm:$0x1]
    %v417 = vperm.slane %v415, 0
    %v435 = vunpack.c.l.b16 %v399
    %v436 = vunpack.c.l.b16 %v400
    %v437 = vunpack.c.l.b16 %v401
    %v438 = vunpack.c.l.b16 %v402
    %v439 = vunpack.c.l.b16 %v403
    %v440 = vunpack.c.l.b16 %v404
    %v441 = vunpack.c.l.b16 %v405
    %v442 = vunpack.c.l.b16 %v406
    %v443 = vunpack.c.l.b16 %v407
    %v444 = vunpack.c.l.b16 %v408
    %v445 = vunpack.c.l.b16 %v409
    %v446 = vunpack.c.l.b16 %v410
    %v447 = vunpack.c.l.b16 %v411
    %v448 = vunpack.c.l.b16 %v412
    %v449 = vunpack.c.l.b16 %v413
    %v450 = vunpack.c.l.b16 %v414
    %v451 = vpack.c.b16 %v436, %v435
    %v452 = vpack.c.b16 %v438, %v437
    %v453 = vpack.c.b16 %v440, %v439
    %v454 = vpack.c.b16 %v442, %v441
    %v455 = vpack.c.b16 %v444, %v443
    %v456 = vpack.c.b16 %v446, %v445
    %v457 = vpack.c.b16 %v448, %v447
    %v458 = vpack.c.b16 %v450, %v449
    %467 = vmatpush.bf16.msra.mxu0 %v458
    %468 = vmatpush.bf16.msra.mxu0 %v457
    %469 = vmatpush.bf16.msra.mxu0 %v456
    %470 = vmatpush.bf16.msra.mxu0 %v455
    %471 = vmatpush.bf16.msra.mxu0 %v454
    %472 = vmatpush.bf16.msra.mxu0 %v453
    %473 = vmatpush.bf16.msra.mxu0 %v452
    %474 = vmatpush.bf16.msra.mxu0 %v451
    %475 = vmatmul.bf16.gmra.mxu0 %v398
    %v476 = vpop.f32.mrf.mxu0
    %v477 = vadd.f32 %v417, %v476
    %v478 = vpop.f32.mrf.mxu0
    %479 = vdwg.mxu0
    %v480 = vmax.f32 %v477, 0.0
    %v481 = vpack.c.bf16 %v480, %v480
    %v482 = vld [vmem:[#allocation14] sm:$0xf]
    %v483 = vld [vmem:[#allocation14 + $0x4] sm:$0xf]
    %v484 = vld [vmem:[#allocation14 + $0x8] sm:$0xf]
    %v485 = vld [vmem:[#allocation14 + $0xc] sm:$0xf]
    %v486 = vld [vmem:[#allocation14 + $0x10] sm:$0xf]
    %v487 = vld [vmem:[#allocation14 + $0x14] sm:$0xf]
    %v488 = vld [vmem:[#allocation14 + $0x18] sm:$0xf]
    %v489 = vld [vmem:[#allocation14 + $0x1c] sm:$0xf]
    %v490 = vld [vmem:[#allocation14 + $0x20] sm:$0xf]
    %v491 = vld [vmem:[#allocation14 + $0x24] sm:$0xf]
    %v492 = vld [vmem:[#allocation14 + $0x28] sm:$0xf]
    %v493 = vld [vmem:[#allocation14 + $0x2c] sm:$0xf]
    %v494 = vld [vmem:[#allocation14 + $0x30] sm:$0xf]
    %v495 = vld [vmem:[#allocation14 + $0x34] sm:$0xf]
    %v496 = vld [vmem:[#allocation14 + $0x38] sm:$0xf]
    %v497 = vld [vmem:[#allocation14 + $0x3c] sm:$0xf]
    %v498 = vld [vmem:[#allocation16] sm:$0x1]
    %v500 = vperm.slane %v498, 0
    %v518 = vunpack.c.l.b16 %v482
    %v519 = vunpack.c.l.b16 %v483
    %v520 = vunpack.c.l.b16 %v484
    %v521 = vunpack.c.l.b16 %v485
    %v522 = vunpack.c.l.b16 %v486
    %v523 = vunpack.c.l.b16 %v487
    %v524 = vunpack.c.l.b16 %v488
    %v525 = vunpack.c.l.b16 %v489
    %v526 = vunpack.c.l.b16 %v490
    %v527 = vunpack.c.l.b16 %v491
    %v528 = vunpack.c.l.b16 %v492
    %v529 = vunpack.c.l.b16 %v493
    %v530 = vunpack.c.l.b16 %v494
    %v531 = vunpack.c.l.b16 %v495
    %v532 = vunpack.c.l.b16 %v496
    %v533 = vunpack.c.l.b16 %v497
    %v534 = vpack.c.b16 %v519, %v518
    %v535 = vpack.c.b16 %v521, %v520
    %v536 = vpack.c.b16 %v523, %v522
    %v537 = vpack.c.b16 %v525, %v524
    %v538 = vpack.c.b16 %v527, %v526
    %v539 = vpack.c.b16 %v529, %v528
    %v540 = vpack.c.b16 %v531, %v530
    %v541 = vpack.c.b16 %v533, %v532
    %550 = vmatpush.bf16.msra.mxu0 %v541
    %551 = vmatpush.bf16.msra.mxu0 %v540
    %552 = vmatpush.bf16.msra.mxu0 %v539
    %553 = vmatpush.bf16.msra.mxu0 %v538
    %554 = vmatpush.bf16.msra.mxu0 %v537
    %555 = vmatpush.bf16.msra.mxu0 %v536
    %556 = vmatpush.bf16.msra.mxu0 %v535
    %557 = vmatpush.bf16.msra.mxu0 %v534
    %558 = vmatmul.bf16.gmra.mxu0 %v481
    %v559 = vpop.f32.mrf.mxu0
    %v560 = vadd.f32 %v500, %v559
    %v561 = vpop.f32.mrf.mxu0
    %562 = vdwg.mxu0
    %v563 = vxor.u32 %v560, 2147483648
    %v564 = vmul.f32 %v563, 1.442695
    %v565 = vpow.pop %v564
    %v566 = vadd.f32 %v565, 1.0
    %v567 = vrcp.pop %v566
    %v568 = vmul.f32 %v566, %v567
    %v569 = vsub.f32 1.0, %v568
    %v570 = vmul.f32 %v567, %v569
    %v571 = vadd.f32 %v567, %v570
    %vm572 = vweird.f32 %v566
    %vm573 = vweird.f32 %v567
    %vm574 = vmor %vm572, %vm573
    %v575 = vsel %vm574, %v567, %v571
    %v576 = vand.u32 2147483647, %v566
    %vm577 = vcmp.eq.f32.partialorder %v576, 8.507059e+37
    %v578 = vand.u32 %v566, 2147483648
    %v579 = vor.u32 1.1754944e-38, %v578
    %v580 = vsel %vm577, %v579, %v575
    %v581 = vmul.f32 1.0, %v580
    %v582 = vpack.c.bf16 %v581, %v581
    %vm583 = vcmask 388096
    %584 = vst.msk [vmem:[#allocation17] sm:$0xf] %vm583, %v582
    %v585 = vpack.c.bf16 %v376, %v376
    %vm586 = vcmask 584704
    %587 = vst.msk [vmem:[#allocation18] sm:$0xf] %vm586, %v585
    %v588 = vpack.c.bf16 %v389, %v389
    %589 = vst.msk [vmem:[#allocation20] sm:$0xf] %vm586, %v588
    // Predicated region
    $region86: #{char_cvae_forward.1} parent=1 // pred_check
      _
    $region87: #{char_cvae_forward.1} parent=1 // pred_check_branch
      %591 = sbr.rel (0) target = $region89
    $region88: #{char_cvae_forward.1} parent=1 // pred_region
      %593 = vsyncadd [#allocation4], 0
      %s595 = sshll.u32 [#allocation17], 4
      %s596 = int_to_ptr.vmem [resolvable:$true] %s595
      %s597 = sshll.u32 %s12, 4
      %s598 = int_to_ptr.hbm [resolvable:$true] %s597
      %600 = dma.vmem_to_hbm [thread:$0]  %s596, 64, %s598, [#allocation4]
    $region89: #{char_cvae_forward.1} parent=1 // pred_fallthru
      _
    // Predicated region
    $region90: #{char_cvae_forward.1} parent=1 // pred_check
      _
    $region91: #{char_cvae_forward.1} parent=1 // pred_check_branch
      %602 = sbr.rel (0) target = $region93
    $region92: #{char_cvae_forward.1} parent=1 // pred_region
      %604 = vsyncadd [#allocation19], 0
      %s606 = sshll.u32 [#allocation18], 4
      %s607 = int_to_ptr.vmem [resolvable:$true] %s606
      %s608 = sshll.u32 %s13, 4
      %s609 = int_to_ptr.hbm [resolvable:$true] %s608
      %611 = dma.vmem_to_hbm [thread:$0]  %s607, 64, %s609, [#allocation19]
    $region93: #{char_cvae_forward.1} parent=1 // pred_fallthru
      _
    // Predicated region
    $region94: #{char_cvae_forward.1} parent=1 // pred_check
      _
    $region95: #{char_cvae_forward.1} parent=1 // pred_check_branch
      %613 = sbr.rel (0) target = $region97
    $region96: #{char_cvae_forward.1} parent=1 // pred_region
      %615 = vsyncadd [#allocation19], 0
      %s617 = sshll.u32 [#allocation20], 4
      %s618 = int_to_ptr.vmem [resolvable:$true] %s617
      %s619 = sshll.u32 %s14, 4
      %s620 = int_to_ptr.hbm [resolvable:$true] %s619
      %622 = dma.vmem_to_hbm [thread:$0]  %s618, 64, %s620, [#allocation19]
    $region97: #{char_cvae_forward.1} parent=1 // pred_fallthru
      _
    // Predicated region
    $region98: #{char_cvae_forward.1} parent=1 // pred_check
      _
    $region99: #{char_cvae_forward.1} parent=1 // pred_check_branch
      %624 = sbr.rel (0) target = $region101
    $region100: #{char_cvae_forward.1} parent=1 // pred_region
      %626 = dma.done [#allocation4], 64
    $region101: #{char_cvae_forward.1} parent=1 // pred_fallthru
      _
    // Predicated region
    $region102: #{char_cvae_forward.1} parent=1 // pred_check
      _
    $region103: #{char_cvae_forward.1} parent=1 // pred_check_branch
      %628 = sbr.rel (0) target = $region105
    $region104: #{char_cvae_forward.1} parent=1 // pred_region
      %630 = dma.done [#allocation19], 64
    $region105: #{char_cvae_forward.1} parent=1 // pred_fallthru
      _
    // Predicated region
    $region106: #{char_cvae_forward.1} parent=1 // pred_check
      _
    $region107: #{char_cvae_forward.1} parent=1 // pred_check_branch
      %632 = sbr.rel (0) target = $region109
    $region108: #{char_cvae_forward.1} parent=1 // pred_region
      %634 = dma.done [#allocation19], 64
    $region109: #{char_cvae_forward.1} parent=1 // pred_fallthru
      _
    %635 = vsyncpa [#allocation3], 1
    %636 = vsyncpa [#allocation6], 1
    %637 = vsyncpa [#allocation9], 1
    %638 = vsyncpa [#allocation12], 1
    %639 = vsyncpa [#allocation15], 1
    %640 = vsyncpa [#allocation4], 1
    %641 = vsyncpa [#allocation19], 1

</llo_original>
